<compile_context>
chip_gen: v5e
topology: v5e:2x2
jax: 0.10.0
libtpu: 0.0.40
codegen_flags: <defaults>
</compile_context>

<pallas_src>
import functools

import jax
import jax.numpy as jnp
from jax.experimental import pallas as pl
from jax.experimental.pallas import tpu as pltpu


def _rel_pos_copy_kernel(flipped_ref, out_ref):
    """Slice-copy gather.

    flipped_ref: (L, D) flipped relative-position table (VMEM resident),
                 L = 2*M - 1 with M = max_cached_len
    out_ref:     (TI, TJ, D) output block covering query rows [i0, i0+TI)
                 and key columns [j0, j0+TJ)

    out[i0+r, j0+c, :] = flipped[(M-1 - (i0+r)) + (j0+c), :]
    i.e. each query row is a contiguous TJ-row window of the flipped table.
    """
    L, _ = flipped_ref.shape
    TI, TJ, _ = out_ref.shape
    M = (L + 1) // 2  # max_cached_len

    i0 = pl.program_id(0) * TI  # first query row handled by this block
    j0 = pl.program_id(1) * TJ  # first key column handled by this block

    # Static unroll over the TI query rows of this block (TI is small).
    for r in range(TI):
        raw = (M - 1) - (i0 + r) + j0
        # Clamp keeps reads in-bounds for padded (partial) edge blocks; the
        # corresponding padded output rows are discarded by Pallas anyway.
        start = jnp.clip(raw, 0, L - TJ)
        out_ref[r] = flipped_ref[pl.ds(start, TJ), :]


def _pick_tiles(seq_len: int):
    ti = min(seq_len, 8)                       # query rows per grid step
    tj = seq_len if seq_len <= 512 else 512    # key cols per grid step
    return ti, tj


@functools.partial(jax.jit, static_argnames=("seq_len", "max_cached_len"))
def _rel_pos_encoding_call(emb: jnp.ndarray, seq_len: int, max_cached_len: int):
    L, D = emb.shape
    assert L == 2 * max_cached_len - 1
    assert seq_len <= max_cached_len

    ti, tj = _pick_tiles(seq_len)
    grid = (pl.cdiv(seq_len, ti), pl.cdiv(seq_len, tj))

    # One-time flip so every output row is a forward contiguous slice.
    flipped = jnp.flip(emb, axis=0)

    elt = jnp.dtype(emb.dtype).itemsize
    cost = pl.CostEstimate(
        flops=0,
        transcendentals=0,
        bytes_accessed=seq_len * seq_len * D * elt + L * D * elt,
    )

    return pl.pallas_call(
        _rel_pos_copy_kernel,
        out_shape=jax.ShapeDtypeStruct((seq_len, seq_len, D), emb.dtype),
        grid_spec=pltpu.PrefetchScalarGridSpec(
            num_scalar_prefetch=0,
            grid=grid,
            in_specs=[pl.BlockSpec((L, D), lambda i, j: (0, 0))],
            out_specs=pl.BlockSpec((ti, tj, D), lambda i, j: (i, j, 0)),
        ),
        compiler_params=pltpu.CompilerParams(
            dimension_semantics=("parallel", "parallel")),
        cost_estimate=cost,
    )(flipped)


def _expand_cache(emb: jnp.ndarray, old_max_len: int, new_max_len: int) -> jnp.ndarray:
    """Pure-JAX port of RelativePositionalEncoding._expand_cache (setup glue)."""
    d_model = emb.shape[1]
    old_start = new_max_len - old_max_len
    pieces = []
    if old_start > 0:
        steps = jnp.arange(old_start, 0, -1, dtype=emb.dtype)[:, None]
        pieces.append(emb[0][None, :] + (emb[0] - emb[1])[None, :] * steps)
    pieces.append(emb)
    remaining = (2 * new_max_len - 1) - (old_start + emb.shape[0])
    if remaining > 0:
        steps = jnp.arange(1, remaining + 1, dtype=emb.dtype)[:, None]
        pieces.append(emb[-1][None, :] + (emb[-1] - emb[-2])[None, :] * steps)
    out = jnp.concatenate(pieces, axis=0)
    assert out.shape == (2 * new_max_len - 1, d_model)
    return out


class RelativePositionalEncoding:
    """JAX/Pallas equivalent of the PyTorch module."""

    def __init__(self, d_model: int, key: jax.Array):
        self.d_model = d_model
        initial_size = 32
        self.max_cached_len = initial_size
        # Deterministic synthetic init (module uses zeros; zeros would make the
        # gather trivially unverifiable, so use a fixed-key normal init).
        self.rel_pos_emb = jax.random.normal(
            key, (2 * initial_size - 1, d_model), dtype=jnp.float32)

    def forward(self, seq_len: int) -> jnp.ndarray:
        if seq_len > self.max_cached_len:
            self.rel_pos_emb = _expand_cache(
                self.rel_pos_emb, self.max_cached_len, seq_len)
            self.max_cached_len = seq_len
        return _rel_pos_encoding_call(
            self.rel_pos_emb, seq_len, self.max_cached_len)

    __call__ = forward


if __name__ == "__main__":
    key = jax.random.PRNGKey(0)
    d_model = 32
    module = RelativePositionalEncoding(d_model, key)

    def reference(seq_len: int) -> jnp.ndarray:
        positions = jnp.arange(seq_len)
        rel_pos = (positions[:, None] - positions[None, :]
                   + (module.max_cached_len - 1))
        return module.rel_pos_emb[rel_pos]

    # Primary small run.
    seq_len = 8
    out = jax.block_until_ready(module(seq_len))
    assert out.shape == (seq_len, seq_len, d_model), out.shape
    assert out.dtype == jnp.float32
    assert jnp.allclose(out, reference(seq_len), atol=1e-6), "mismatch (S=8)"

    # Exercise a multi-step grid (2 query-row tiles) as well.
    seq_len2 = 16
    out2 = jax.block_until_ready(module(seq_len2))
    assert out2.shape == (seq_len2, seq_len2, d_model), out2.shape
    assert jnp.allclose(out2, reference(seq_len2), atol=1e-6), "mismatch (S=16)"

    print("KERNEL_OK")
</pallas_src>

<mosaic_0001>
module attributes {stable_mosaic.version = 11 : i64} {
  func.func @_rel_pos_copy_kernel(%arg0: i32, %arg1: i32, %arg2: memref<63x32xf32, #tpu.memory_space<vmem>>, %arg3: memref<8x8x32xf32, #tpu.memory_space<vmem>>) attributes {dimension_semantics = [#tpu.dimension_semantics<parallel>, #tpu.dimension_semantics<parallel>], iteration_bounds = array<i64: 1, 1>, scalar_prefetch = 0 : i64, scratch_operands = 0 : i64, tpu.core_type = #tpu.core_type<tc>, window_params = [{pipeline_mode = #tpu.pipeline_mode<synchronous>, transform_indices = @transform_0, window_bounds = array<i64: 63, 32>}, {transform_indices = @transform_1, window_bounds = array<i64: 8, 8, 32>}]} {
    %c8_i32 = arith.constant 8 : i32
    %0 = arith.muli %arg0, %c8_i32 : i32
    %c8_i32_0 = arith.constant 8 : i32
    %1 = arith.muli %arg1, %c8_i32_0 : i32
    %c0_i32 = arith.constant 0 : i32
    %2 = arith.addi %0, %c0_i32 : i32
    %c31_i32 = arith.constant 31 : i32
    %3 = arith.subi %c31_i32, %2 : i32
    %4 = arith.addi %3, %1 : i32
    %c0_i32_1 = arith.constant 0 : i32
    %c55_i32 = arith.constant 55 : i32
    %5 = arith.maxsi %c0_i32_1, %4 : i32
    %6 = arith.minsi %c55_i32, %5 : i32
    %7 = arith.index_cast %6 : i32 to index
    %c0 = arith.constant 0 : index
    %8 = vector.load %arg2[%7, %c0] : memref<63x32xf32, #tpu.memory_space<vmem>>, vector<8x32xf32>
    %c0_2 = arith.constant 0 : index
    %c0_3 = arith.constant 0 : index
    %c0_4 = arith.constant 0 : index
    %9 = vector.load %arg3[%c0_2, %c0_3, %c0_4] : memref<8x8x32xf32, #tpu.memory_space<vmem>>, vector<1x8x32xf32>
    %10 = vector.shape_cast %9 : vector<1x8x32xf32> to vector<8x32xf32>
    %11 = vector.shape_cast %8 : vector<8x32xf32> to vector<1x8x32xf32>
    tpu.vector_store %arg3[%c0_2, %c0_3, %c0_4], %11 {strides = array<i32>} : memref<8x8x32xf32, #tpu.memory_space<vmem>>, vector<1x8x32xf32>,
    %c1_i32 = arith.constant 1 : i32
    %12 = arith.addi %0, %c1_i32 : i32
    %c31_i32_5 = arith.constant 31 : i32
    %13 = arith.subi %c31_i32_5, %12 : i32
    %14 = arith.addi %13, %1 : i32
    %c0_i32_6 = arith.constant 0 : i32
    %c55_i32_7 = arith.constant 55 : i32
    %15 = arith.maxsi %c0_i32_6, %14 : i32
    %16 = arith.minsi %c55_i32_7, %15 : i32
    %17 = arith.index_cast %16 : i32 to index
    %c0_8 = arith.constant 0 : index
    %18 = vector.load %arg2[%17, %c0_8] : memref<63x32xf32, #tpu.memory_space<vmem>>, vector<8x32xf32>
    %c1 = arith.constant 1 : index
    %c0_9 = arith.constant 0 : index
    %c0_10 = arith.constant 0 : index
    %19 = vector.load %arg3[%c1, %c0_9, %c0_10] : memref<8x8x32xf32, #tpu.memory_space<vmem>>, vector<1x8x32xf32>
    %20 = vector.shape_cast %19 : vector<1x8x32xf32> to vector<8x32xf32>
    %21 = vector.shape_cast %18 : vector<8x32xf32> to vector<1x8x32xf32>
    tpu.vector_store %arg3[%c1, %c0_9, %c0_10], %21 {strides = array<i32>} : memref<8x8x32xf32, #tpu.memory_space<vmem>>, vector<1x8x32xf32>,
    %c2_i32 = arith.constant 2 : i32
    %22 = arith.addi %0, %c2_i32 : i32
    %c31_i32_11 = arith.constant 31 : i32
    %23 = arith.subi %c31_i32_11, %22 : i32
    %24 = arith.addi %23, %1 : i32
    %c0_i32_12 = arith.constant 0 : i32
    %c55_i32_13 = arith.constant 55 : i32
    %25 = arith.maxsi %c0_i32_12, %24 : i32
    %26 = arith.minsi %c55_i32_13, %25 : i32
    %27 = arith.index_cast %26 : i32 to index
    %c0_14 = arith.constant 0 : index
    %28 = vector.load %arg2[%27, %c0_14] : memref<63x32xf32, #tpu.memory_space<vmem>>, vector<8x32xf32>
    %c2 = arith.constant 2 : index
    %c0_15 = arith.constant 0 : index
    %c0_16 = arith.constant 0 : index
    %29 = vector.load %arg3[%c2, %c0_15, %c0_16] : memref<8x8x32xf32, #tpu.memory_space<vmem>>, vector<1x8x32xf32>
    %30 = vector.shape_cast %29 : vector<1x8x32xf32> to vector<8x32xf32>
    %31 = vector.shape_cast %28 : vector<8x32xf32> to vector<1x8x32xf32>
    tpu.vector_store %arg3[%c2, %c0_15, %c0_16], %31 {strides = array<i32>} : memref<8x8x32xf32, #tpu.memory_space<vmem>>, vector<1x8x32xf32>,
    %c3_i32 = arith.constant 3 : i32
    %32 = arith.addi %0, %c3_i32 : i32
    %c31_i32_17 = arith.constant 31 : i32
    %33 = arith.subi %c31_i32_17, %32 : i32
    %34 = arith.addi %33, %1 : i32
    %c0_i32_18 = arith.constant 0 : i32
    %c55_i32_19 = arith.constant 55 : i32
    %35 = arith.maxsi %c0_i32_18, %34 : i32
    %36 = arith.minsi %c55_i32_19, %35 : i32
    %37 = arith.index_cast %36 : i32 to index
    %c0_20 = arith.constant 0 : index
    %38 = vector.load %arg2[%37, %c0_20] : memref<63x32xf32, #tpu.memory_space<vmem>>, vector<8x32xf32>
    %c3 = arith.constant 3 : index
    %c0_21 = arith.constant 0 : index
    %c0_22 = arith.constant 0 : index
    %39 = vector.load %arg3[%c3, %c0_21, %c0_22] : memref<8x8x32xf32, #tpu.memory_space<vmem>>, vector<1x8x32xf32>
    %40 = vector.shape_cast %39 : vector<1x8x32xf32> to vector<8x32xf32>
    %41 = vector.shape_cast %38 : vector<8x32xf32> to vector<1x8x32xf32>
    tpu.vector_store %arg3[%c3, %c0_21, %c0_22], %41 {strides = array<i32>} : memref<8x8x32xf32, #tpu.memory_space<vmem>>, vector<1x8x32xf32>,
    %c4_i32 = arith.constant 4 : i32
    %42 = arith.addi %0, %c4_i32 : i32
    %c31_i32_23 = arith.constant 31 : i32
    %43 = arith.subi %c31_i32_23, %42 : i32
    %44 = arith.addi %43, %1 : i32
    %c0_i32_24 = arith.constant 0 : i32
    %c55_i32_25 = arith.constant 55 : i32
    %45 = arith.maxsi %c0_i32_24, %44 : i32
    %46 = arith.minsi %c55_i32_25, %45 : i32
    %47 = arith.index_cast %46 : i32 to index
    %c0_26 = arith.constant 0 : index
    %48 = vector.load %arg2[%47, %c0_26] : memref<63x32xf32, #tpu.memory_space<vmem>>, vector<8x32xf32>
    %c4 = arith.constant 4 : index
    %c0_27 = arith.constant 0 : index
    %c0_28 = arith.constant 0 : index
    %49 = vector.load %arg3[%c4, %c0_27, %c0_28] : memref<8x8x32xf32, #tpu.memory_space<vmem>>, vector<1x8x32xf32>
    %50 = vector.shape_cast %49 : vector<1x8x32xf32> to vector<8x32xf32>
    %51 = vector.shape_cast %48 : vector<8x32xf32> to vector<1x8x32xf32>
    tpu.vector_store %arg3[%c4, %c0_27, %c0_28], %51 {strides = array<i32>} : memref<8x8x32xf32, #tpu.memory_space<vmem>>, vector<1x8x32xf32>,
    %c5_i32 = arith.constant 5 : i32
    %52 = arith.addi %0, %c5_i32 : i32
    %c31_i32_29 = arith.constant 31 : i32
    %53 = arith.subi %c31_i32_29, %52 : i32
    %54 = arith.addi %53, %1 : i32
    %c0_i32_30 = arith.constant 0 : i32
    %c55_i32_31 = arith.constant 55 : i32
    %55 = arith.maxsi %c0_i32_30, %54 : i32
    %56 = arith.minsi %c55_i32_31, %55 : i32
    %57 = arith.index_cast %56 : i32 to index
    %c0_32 = arith.constant 0 : index
    %58 = vector.load %arg2[%57, %c0_32] : memref<63x32xf32, #tpu.memory_space<vmem>>, vector<8x32xf32>
    %c5 = arith.constant 5 : index
    %c0_33 = arith.constant 0 : index
    %c0_34 = arith.constant 0 : index
    %59 = vector.load %arg3[%c5, %c0_33, %c0_34] : memref<8x8x32xf32, #tpu.memory_space<vmem>>, vector<1x8x32xf32>
    %60 = vector.shape_cast %59 : vector<1x8x32xf32> to vector<8x32xf32>
    %61 = vector.shape_cast %58 : vector<8x32xf32> to vector<1x8x32xf32>
    tpu.vector_store %arg3[%c5, %c0_33, %c0_34], %61 {strides = array<i32>} : memref<8x8x32xf32, #tpu.memory_space<vmem>>, vector<1x8x32xf32>,
    %c6_i32 = arith.constant 6 : i32
    %62 = arith.addi %0, %c6_i32 : i32
    %c31_i32_35 = arith.constant 31 : i32
    %63 = arith.subi %c31_i32_35, %62 : i32
    %64 = arith.addi %63, %1 : i32
    %c0_i32_36 = arith.constant 0 : i32
    %c55_i32_37 = arith.constant 55 : i32
    %65 = arith.maxsi %c0_i32_36, %64 : i32
    %66 = arith.minsi %c55_i32_37, %65 : i32
    %67 = arith.index_cast %66 : i32 to index
    %c0_38 = arith.constant 0 : index
    %68 = vector.load %arg2[%67, %c0_38] : memref<63x32xf32, #tpu.memory_space<vmem>>, vector<8x32xf32>
    %c6 = arith.constant 6 : index
    %c0_39 = arith.constant 0 : index
    %c0_40 = arith.constant 0 : index
    %69 = vector.load %arg3[%c6, %c0_39, %c0_40] : memref<8x8x32xf32, #tpu.memory_space<vmem>>, vector<1x8x32xf32>
    %70 = vector.shape_cast %69 : vector<1x8x32xf32> to vector<8x32xf32>
    %71 = vector.shape_cast %68 : vector<8x32xf32> to vector<1x8x32xf32>
    tpu.vector_store %arg3[%c6, %c0_39, %c0_40], %71 {strides = array<i32>} : memref<8x8x32xf32, #tpu.memory_space<vmem>>, vector<1x8x32xf32>,
    %c7_i32 = arith.constant 7 : i32
    %72 = arith.addi %0, %c7_i32 : i32
    %c31_i32_41 = arith.constant 31 : i32
    %73 = arith.subi %c31_i32_41, %72 : i32
    %74 = arith.addi %73, %1 : i32
    %c0_i32_42 = arith.constant 0 : i32
    %c55_i32_43 = arith.constant 55 : i32
    %75 = arith.maxsi %c0_i32_42, %74 : i32
    %76 = arith.minsi %c55_i32_43, %75 : i32
    %77 = arith.index_cast %76 : i32 to index
    %c0_44 = arith.constant 0 : index
    %78 = vector.load %arg2[%77, %c0_44] : memref<63x32xf32, #tpu.memory_space<vmem>>, vector<8x32xf32>
    %c7 = arith.constant 7 : index
    %c0_45 = arith.constant 0 : index
    %c0_46 = arith.constant 0 : index
    %79 = vector.load %arg3[%c7, %c0_45, %c0_46] : memref<8x8x32xf32, #tpu.memory_space<vmem>>, vector<1x8x32xf32>
    %80 = vector.shape_cast %79 : vector<1x8x32xf32> to vector<8x32xf32>
    %81 = vector.shape_cast %78 : vector<8x32xf32> to vector<1x8x32xf32>
    tpu.vector_store %arg3[%c7, %c0_45, %c0_46], %81 {strides = array<i32>} : memref<8x8x32xf32, #tpu.memory_space<vmem>>, vector<1x8x32xf32>,
    return
  }
  func.func @transform_0(%arg0: i32, %arg1: i32) -> (i32, i32) {
    %c0_i32 = arith.constant 0 : i32
    %c0_i32_0 = arith.constant 0 : i32
    %c0_i32_1 = arith.constant 0 : i32
    return %c0_i32, %c0_i32_0 : i32, i32
  }
  func.func @transform_1(%arg0: i32, %arg1: i32) -> (i32, i32, i32) {
    %c0_i32 = arith.constant 0 : i32
    %c0_i32_0 = arith.constant 0 : i32
    return %arg0, %arg1, %c0_i32 : i32, i32, i32
  }
}

</mosaic_0001>

<llo_original>
// kernel: _rel_pos_encoding_call.1
$region0: #{_rel_pos_encoding_call.1}
  #allocation0 [shape = 'u32[]', space=smem, size = 0x4, offset = 0x4, fixed_abs, tag = 'smem constant byte address 0x4 - core index']
  #allocation1 [shape = 'u32[72,128]{1,0:T(1,128)}', space=vmem, size = 0x9000, scoped, tag = 'internal scratch']
  %s0 = inlined_call_operand.vmem [shape: f32[63,32], index: 0, kind: input, shape index: {}]
  %s1 = inlined_call_operand.hbm [shape: f32[8,8,32], index: 1, kind: output, shape index: {}]
  %s2 = sld [smem:[#allocation0]]
  $region14: #{_rel_pos_encoding_call.1} parent=0
    _
  %s4 = ssub.s32 1, %s2
  %s5 = scalar_select 0, %s4, %s2
  $region1: #{_rel_pos_encoding_call.1} parent=0
    #allocation2 [shape = 'u8[32768]{0}', space=vmem, size = 0x8000, scoped, tag = 'output window, operand 0, single buffered']
    #allocation3 [shape = 's32[1]{0}', space=sflag, size = 0x4, scoped, tag = 'scoped memory for _rel_pos_encoding_call.1']
    %6 = vsyncpa [#allocation3], 0
    // Predicated region
    $region2: #{_rel_pos_encoding_call.1} parent=1 // pred_check
      _
    $region3: #{_rel_pos_encoding_call.1} parent=1 // pred_check_branch
      %8 = sbr.rel (0) target = $region5
    $region4: #{_rel_pos_encoding_call.1} parent=1 // pred_region
      _
    $region5: #{_rel_pos_encoding_call.1} parent=1 // pred_fallthru
      _
    %s9 = smul.u32 0, 8
    %s10 = smul.u32 0, 8
    %s11 = ssub.s32 31, %s9
    %s12 = sadd.s32 %s11, %s10
    %p13 = scmp.gt.s32.totalorder %s12, 0
    %s14 = scalar_select %p13, %s12, 0
    %p15 = scmp.lt.s32.totalorder %s14, 55
    %s16 = scalar_select %p15, %s14, 55
    %s17 = scalar_lea.vmem %s0, %s16
    %v18 = vld [vmem:[%s17] sm:$0xff]
    %vm19 = vcmask 261120
    %20 = vst.msk [vmem:[#allocation2] sm:$0xff] %vm19, %v18
    %s21 = ssub.s32 30, %s9
    %s22 = sadd.s32 %s21, %s10
    %p23 = scmp.gt.s32.totalorder %s22, 0
    %s24 = scalar_select %p23, %s22, 0
    %p25 = scmp.lt.s32.totalorder %s24, 55
    %s26 = scalar_select %p25, %s24, 55
    %s27 = scalar_lea.vmem %s0, %s26
    %v28 = vld [vmem:[%s27] sm:$0xff]
    %s29 = scalar_lea.vmem [#allocation2], 8
    %30 = vst.msk [vmem:[%s29] sm:$0xff] %vm19, %v28
    %s31 = ssub.s32 29, %s9
    %s32 = sadd.s32 %s31, %s10
    %p33 = scmp.gt.s32.totalorder %s32, 0
    %s34 = scalar_select %p33, %s32, 0
    %p35 = scmp.lt.s32.totalorder %s34, 55
    %s36 = scalar_select %p35, %s34, 55
    %s37 = scalar_lea.vmem %s0, %s36
    %v38 = vld [vmem:[%s37] sm:$0xff]
    %s39 = scalar_lea.vmem [#allocation2], 16
    %40 = vst.msk [vmem:[%s39] sm:$0xff] %vm19, %v38
    %s41 = ssub.s32 28, %s9
    %s42 = sadd.s32 %s41, %s10
    %p43 = scmp.gt.s32.totalorder %s42, 0
    %s44 = scalar_select %p43, %s42, 0
    %p45 = scmp.lt.s32.totalorder %s44, 55
    %s46 = scalar_select %p45, %s44, 55
    %s47 = scalar_lea.vmem %s0, %s46
    %v48 = vld [vmem:[%s47] sm:$0xff]
    %s49 = scalar_lea.vmem [#allocation2], 24
    %50 = vst.msk [vmem:[%s49] sm:$0xff] %vm19, %v48
    %s51 = ssub.s32 27, %s9
    %s52 = sadd.s32 %s51, %s10
    %p53 = scmp.gt.s32.totalorder %s52, 0
    %s54 = scalar_select %p53, %s52, 0
    %p55 = scmp.lt.s32.totalorder %s54, 55
    %s56 = scalar_select %p55, %s54, 55
    %s57 = scalar_lea.vmem %s0, %s56
    %v58 = vld [vmem:[%s57] sm:$0xff]
    %s59 = scalar_lea.vmem [#allocation2], 32
    %60 = vst.msk [vmem:[%s59] sm:$0xff] %vm19, %v58
    %s61 = ssub.s32 26, %s9
    %s62 = sadd.s32 %s61, %s10
    %p63 = scmp.gt.s32.totalorder %s62, 0
    %s64 = scalar_select %p63, %s62, 0
    %p65 = scmp.lt.s32.totalorder %s64, 55
    %s66 = scalar_select %p65, %s64, 55
    %s67 = scalar_lea.vmem %s0, %s66
    %v68 = vld [vmem:[%s67] sm:$0xff]
    %s69 = scalar_lea.vmem [#allocation2], 40
    %70 = vst.msk [vmem:[%s69] sm:$0xff] %vm19, %v68
    %s71 = ssub.s32 25, %s9
    %s72 = sadd.s32 %s71, %s10
    %p73 = scmp.gt.s32.totalorder %s72, 0
    %s74 = scalar_select %p73, %s72, 0
    %p75 = scmp.lt.s32.totalorder %s74, 55
    %s76 = scalar_select %p75, %s74, 55
    %s77 = scalar_lea.vmem %s0, %s76
    %v78 = vld [vmem:[%s77] sm:$0xff]
    %s79 = scalar_lea.vmem [#allocation2], 48
    %80 = vst.msk [vmem:[%s79] sm:$0xff] %vm19, %v78
    %s81 = ssub.s32 24, %s9
    %s82 = sadd.s32 %s81, %s10
    %p83 = scmp.gt.s32.totalorder %s82, 0
    %s84 = scalar_select %p83, %s82, 0
    %p85 = scmp.lt.s32.totalorder %s84, 55
    %s86 = scalar_select %p85, %s84, 55
    %s87 = scalar_lea.vmem %s0, %s86
    %v88 = vld [vmem:[%s87] sm:$0xff]
    %s89 = scalar_lea.vmem [#allocation2], 56
    %90 = vst.msk [vmem:[%s89] sm:$0xff] %vm19, %v88
    // Predicated region
    $region6: #{_rel_pos_encoding_call.1} parent=1 // pred_check
      _
    $region7: #{_rel_pos_encoding_call.1} parent=1 // pred_check_branch
      %92 = sbr.rel (0) target = $region9
    $region8: #{_rel_pos_encoding_call.1} parent=1 // pred_region
      %94 = vsyncadd [#allocation3], 0
      %s95 = sshll.u32 [#allocation2], 4
      %s96 = int_to_ptr.vmem [resolvable:$true] %s95
      %s97 = sshll.u32 %s1, 4
      %s98 = int_to_ptr.hbm [resolvable:$true] %s97
      %103 = dma.vmem_to_hbm [thread:$0]  %s96, 1024, %s98, [#allocation3], 128, 128, 8
    $region9: #{_rel_pos_encoding_call.1} parent=1 // pred_fallthru
      _
    // Predicated region
    $region10: #{_rel_pos_encoding_call.1} parent=1 // pred_check
      _
    $region11: #{_rel_pos_encoding_call.1} parent=1 // pred_check_branch
      %105 = sbr.rel (0) target = $region13
    $region12: #{_rel_pos_encoding_call.1} parent=1 // pred_region
      %107 = dma.done [#allocation3], 1024
    $region13: #{_rel_pos_encoding_call.1} parent=1 // pred_fallthru
      _
    %108 = vsyncpa [#allocation3], 1

</llo_original>
